<compile_context>
chip_gen: v6e
topology: v6e:2x2x1
jax: 0.10.0
libtpu: 0.0.40
codegen_flags: <defaults>
</compile_context>

<pallas_src>
import functools

import jax
import jax.numpy as jnp
from jax.experimental import pallas as pl
from jax.experimental.pallas import tpu as pltpu


# ----------------------------------------------------------------------------
# Tiling helpers
# ----------------------------------------------------------------------------
_MAX_BLOCK_BYTES = 2 * 1024 * 1024    # per x / out block; double-buffered in+out
                                      # ~8 MiB, safe under v5e's 16 MiB scoped
                                      # VMEM default (and v6e/v7x).
_MIN_SPLIT_BLOCK_BYTES = 256 * 1024   # don't split a fitting batch below this
_TN_MAX = 2048                        # lane-tile cap (multiple of 128)


def _round_up(n, m):
    return ((n + m - 1) // m) * m


def _cdiv(a, b):
    return (a + b - 1) // b


def _lane_tile(n_drugs):
    if n_drugs <= _TN_MAX:
        return n_drugs      # full-extent lane block (valid for any n_drugs)
    return _TN_MAX          # multiple of 128; ragged last lane block is fine


def _row_tile(batch, tn, itemsize):
    bytes_per_row = max(tn * itemsize, 1)
    max_rows = max(8, (_MAX_BLOCK_BYTES // bytes_per_row) // 8 * 8)
    if max_rows >= batch:
        # Whole batch fits in one budget block.  Split into ~4 row blocks only
        # if each block still moves >= _MIN_SPLIT_BLOCK_BYTES (so v7x's two TCs
        # each pipeline >=2 steps); never split into exactly 2 (overhead only
        # on single-TC v5e/v6e).
        quarter = _round_up(_cdiv(batch, 4), 8)
        if quarter < batch and quarter * bytes_per_row >= _MIN_SPLIT_BLOCK_BYTES:
            return quarter
        return batch        # full-extent row block: always a valid block shape
    return max_rows         # multiple of 8; ragged last row block is fine


# ----------------------------------------------------------------------------
# Pallas kernels
#   logsigm : sigmoid(log1p(x) * beta + bias) - sigmoid(bias)
#   sigm    : sigmoid(x * beta + bias)        - sigmoid(bias)
# using sigmoid(z) - sigmoid(b) == 0.5*tanh(0.5*z) + (0.5 - sigmoid(b))
#                               == 0.5*(tanh(0.5*z) - tanh(0.5*b))
# ----------------------------------------------------------------------------
def _gen_sigmoid_kernel(x_ref, beta_ref, bias_ref, c_ref, o_ref, *, non_linearity):
    x = x_ref[...].astype(jnp.float32)
    beta = beta_ref[...].astype(jnp.float32)    # (1, tn) broadcast row
    bias = bias_ref[...].astype(jnp.float32)    # (1, tn) broadcast row
    c = c_ref[...].astype(jnp.float32)          # (1, tn) = 0.5 - sigmoid(bias)

    if non_linearity == "logsigm":
        z = jnp.log1p(x) * beta + bias
    else:  # "sigm"
        z = x * beta + bias

    o_ref[...] = (0.5 * jnp.tanh(0.5 * z) + c).astype(o_ref.dtype)


def _gen_sigmoid_indexed_kernel(x_ref, beta_ref, bias_ref, o_ref, *, non_linearity):
    x = x_ref[...].astype(jnp.float32)
    beta = beta_ref[...].astype(jnp.float32)    # per-element (gathered) beta
    bias = bias_ref[...].astype(jnp.float32)    # per-element (gathered) bias

    if non_linearity == "logsigm":
        z = jnp.log1p(x) * beta + bias
    else:  # "sigm"
        z = x * beta + bias

    # sigmoid(bias) offset computed in-kernel (drops one HBM stream).
    o_ref[...] = (0.5 * (jnp.tanh(0.5 * z) - jnp.tanh(0.5 * bias))).astype(o_ref.dtype)


# ----------------------------------------------------------------------------
# Wrappers
# ----------------------------------------------------------------------------
def generalized_sigmoid(x, beta, bias, *, non_linearity="sigmoid"):
    """y is None path: x (batch, n_drugs), beta/bias (1, n_drugs)."""
    if non_linearity not in ("logsigm", "sigm"):
        # Identity branch of the module (any other string), matching torch.
        return x

    batch, n_drugs = x.shape
    assert beta.shape == (1, n_drugs) and bias.shape == (1, n_drugs)

    # Precompute the tanh-form offset once (removes per-step EUP work).
    c0 = 0.5 - jax.nn.sigmoid(bias.astype(jnp.float32))

    itemsize = jnp.dtype(x.dtype).itemsize
    tn = _lane_tile(n_drugs)
    tb = _row_tile(batch, tn, itemsize)
    grid = (_cdiv(n_drugs, tn), _cdiv(batch, tb))   # lane OUTER, rows inner

    n_elem = batch * n_drugs
    cost = pl.CostEstimate(
        flops=5 * n_elem,
        transcendentals=(2 if non_linearity == "logsigm" else 1) * n_elem,
        bytes_accessed=2 * n_elem * itemsize + 3 * n_drugs * 4,
    )

    kernel = functools.partial(_gen_sigmoid_kernel, non_linearity=non_linearity)
    return pl.pallas_call(
        kernel,
        out_shape=jax.ShapeDtypeStruct((batch, n_drugs), x.dtype),
        grid=grid,
        in_specs=[
            pl.BlockSpec((tb, tn), lambda j, i: (i, j)),
            # Parameter rows: block index constant across the inner row sweep,
            # so they are fetched once per lane block (stay VMEM-resident).
            pl.BlockSpec((1, tn), lambda j, i: (0, j)),
            pl.BlockSpec((1, tn), lambda j, i: (0, j)),
            pl.BlockSpec((1, tn), lambda j, i: (0, j)),
        ],
        out_specs=pl.BlockSpec((tb, tn), lambda j, i: (i, j)),
        compiler_params=pltpu.CompilerParams(
            dimension_semantics=("parallel", "parallel"),
        ),
        cost_estimate=cost,
    )(x, beta, bias, c0)


def generalized_sigmoid_indexed(x, y, beta, bias, *, non_linearity="sigmoid"):
    """y-indexed path: x (batch,), y (batch,) int — per-sample beta/bias."""
    if non_linearity not in ("logsigm", "sigm"):
        return x  # identity branch, no kernel

    batch = x.shape[0]

    # TODO(synk): the per-sample gather could be fused in-kernel (scalar
    # prefetch of y + resident (1, n_drugs) beta/bias rows + in-kernel take);
    # kept as XLA glue since it is O(batch), not O(batch * n_drugs).
    beta_g = beta[0][y]
    bias_g = bias[0][y]

    # Lane-dense packing: (batch,) -> (rows, 128) so every vreg/store is full.
    lanes = 128
    padded = _round_up(batch, lanes)
    rows = padded // lanes

    def to2d(a):
        a = a.astype(x.dtype)
        return jnp.pad(a, (0, padded - batch)).reshape(rows, lanes)

    x2, b2, bi2 = to2d(x), to2d(beta_g), to2d(bias_g)

    itemsize = jnp.dtype(x.dtype).itemsize
    tb = _row_tile(rows, lanes, itemsize)
    grid = (_cdiv(rows, tb),)

    cost = pl.CostEstimate(
        flops=6 * padded,
        transcendentals=(3 if non_linearity == "logsigm" else 2) * padded,
        bytes_accessed=4 * padded * itemsize,
    )

    kernel = functools.partial(_gen_sigmoid_indexed_kernel, non_linearity=non_linearity)
    out2 = pl.pallas_call(
        kernel,
        out_shape=jax.ShapeDtypeStruct((rows, lanes), x.dtype),
        grid=grid,
        in_specs=[
            pl.BlockSpec((tb, lanes), lambda i: (i, 0)),
            pl.BlockSpec((tb, lanes), lambda i: (i, 0)),
            pl.BlockSpec((tb, lanes), lambda i: (i, 0)),
        ],
        out_specs=pl.BlockSpec((tb, lanes), lambda i: (i, 0)),
        compiler_params=pltpu.CompilerParams(dimension_semantics=("parallel",)),
        cost_estimate=cost,
    )(x2, b2, bi2)
    return out2.reshape(-1)[:batch]


# ----------------------------------------------------------------------------
# Pure-JAX reference (mirrors the torch forward exactly)
# ----------------------------------------------------------------------------
def _ref(x, beta, bias, non_linearity, y=None):
    if non_linearity == "logsigm":
        if y is None:
            return jax.nn.sigmoid(jnp.log1p(x) * beta + bias) - jax.nn.sigmoid(bias)
        b, be = bias[0][y], beta[0][y]
        return jax.nn.sigmoid(jnp.log1p(x) * be + b) - jax.nn.sigmoid(b)
    elif non_linearity == "sigm":
        if y is None:
            return jax.nn.sigmoid(x * beta + bias) - jax.nn.sigmoid(bias)
        b, be = bias[0][y], beta[0][y]
        return jax.nn.sigmoid(x * be + b) - jax.nn.sigmoid(b)
    else:
        return x


if __name__ == "__main__":
    key = jax.random.PRNGKey(0)
    ok = True

    # Two shape configs: one (8,128)-aligned, one exercising ragged edges.
    for batch, n_drugs in ((32, 128), (20, 96)):
        kx, ky, kb, k1, k2 = jax.random.split(jax.random.fold_in(key, n_drugs), 5)

        # Parameters like the module (beta=1, bias=0) plus a small deterministic
        # perturbation so the test is non-trivial.
        beta = jnp.ones((1, n_drugs), jnp.float32) + 0.1 * jax.random.normal(kb, (1, n_drugs))
        bias = jnp.zeros((1, n_drugs), jnp.float32) + 0.05 * jax.random.normal(ky, (1, n_drugs))

        # Doses are non-negative (log1p domain), as in CPA.
        x = jax.random.uniform(kx, (batch, n_drugs), jnp.float32, 0.0, 3.0)
        y = jax.random.randint(k1, (batch,), 0, n_drugs)
        x1d = jax.random.uniform(k2, (batch,), jnp.float32, 0.0, 3.0)

        for nl in ("logsigm", "sigm", "linear"):
            out = jax.block_until_ready(
                generalized_sigmoid(x, beta, bias, non_linearity=nl)
            )
            ref = _ref(x, beta, bias, nl)
            ok &= bool(jnp.allclose(out, ref, atol=1e-5, rtol=1e-5))

            out_y = jax.block_until_ready(
                generalized_sigmoid_indexed(x1d, y, beta, bias, non_linearity=nl)
            )
            ref_y = _ref(x1d, beta, bias, nl, y=y)
            ok &= bool(jnp.allclose(out_y, ref_y, atol=1e-5, rtol=1e-5))

    if ok:
        print("KERNEL_OK")
    else:
        print("MISMATCH")
</pallas_src>

<mosaic_0001>
module attributes {stable_mosaic.version = 11 : i64} {
  func.func @_gen_sigmoid_kernel(%arg0: i32, %arg1: i32, %arg2: memref<32x128xf32, #tpu.memory_space<vmem>>, %arg3: memref<1x128xf32, #tpu.memory_space<vmem>>, %arg4: memref<1x128xf32, #tpu.memory_space<vmem>>, %arg5: memref<1x128xf32, #tpu.memory_space<vmem>>, %arg6: memref<32x128xf32, #tpu.memory_space<vmem>>) attributes {dimension_semantics = [#tpu.dimension_semantics<parallel>, #tpu.dimension_semantics<parallel>], iteration_bounds = array<i64: 1, 1>, scalar_prefetch = 0 : i64, scratch_operands = 0 : i64, tpu.core_type = #tpu.core_type<tc>, window_params = [{transform_indices = @transform_0, window_bounds = array<i64: 32, 128>}, {transform_indices = @transform_1, window_bounds = array<i64: 1, 128>}, {transform_indices = @transform_2, window_bounds = array<i64: 1, 128>}, {transform_indices = @transform_3, window_bounds = array<i64: 1, 128>}, {transform_indices = @transform_4, window_bounds = array<i64: 32, 128>}]} {
    %c0 = arith.constant 0 : index
    %c0_0 = arith.constant 0 : index
    %0 = vector.load %arg2[%c0, %c0_0] : memref<32x128xf32, #tpu.memory_space<vmem>>, vector<32x128xf32>
    %c0_1 = arith.constant 0 : index
    %c0_2 = arith.constant 0 : index
    %1 = vector.load %arg3[%c0_1, %c0_2] : memref<1x128xf32, #tpu.memory_space<vmem>>, vector<1x128xf32>
    %c0_3 = arith.constant 0 : index
    %c0_4 = arith.constant 0 : index
    %2 = vector.load %arg4[%c0_3, %c0_4] : memref<1x128xf32, #tpu.memory_space<vmem>>, vector<1x128xf32>
    %c0_5 = arith.constant 0 : index
    %c0_6 = arith.constant 0 : index
    %3 = vector.load %arg5[%c0_5, %c0_6] : memref<1x128xf32, #tpu.memory_space<vmem>>, vector<1x128xf32>
    %4 = math.log1p %0 : vector<32x128xf32>
    %5 = vector.broadcast %1 : vector<1x128xf32> to vector<32x128xf32>
    %6 = arith.mulf %4, %5 : vector<32x128xf32>
    %7 = vector.broadcast %2 : vector<1x128xf32> to vector<32x128xf32>
    %8 = arith.addf %6, %7 : vector<32x128xf32>
    %cst = arith.constant 5.000000e-01 : f32
    %9 = vector.broadcast %cst : f32 to vector<32x128xf32>
    %10 = arith.mulf %9, %8 : vector<32x128xf32>
    %11 = math.tanh %10 : vector<32x128xf32>
    %cst_7 = arith.constant 5.000000e-01 : f32
    %12 = vector.broadcast %cst_7 : f32 to vector<32x128xf32>
    %13 = arith.mulf %12, %11 : vector<32x128xf32>
    %14 = vector.broadcast %3 : vector<1x128xf32> to vector<32x128xf32>
    %15 = arith.addf %13, %14 : vector<32x128xf32>
    %c0_8 = arith.constant 0 : index
    %c0_9 = arith.constant 0 : index
    %16 = vector.load %arg6[%c0_8, %c0_9] : memref<32x128xf32, #tpu.memory_space<vmem>>, vector<32x128xf32>
    tpu.vector_store %arg6[%c0_8, %c0_9], %15 {strides = array<i32>} : memref<32x128xf32, #tpu.memory_space<vmem>>, vector<32x128xf32>,
    return
  }
  func.func @transform_0(%arg0: i32, %arg1: i32) -> (i32, i32) {
    %c0_i32 = arith.constant 0 : i32
    return %arg1, %arg0 : i32, i32
  }
  func.func @transform_1(%arg0: i32, %arg1: i32) -> (i32, i32) {
    %c0_i32 = arith.constant 0 : i32
    %c0_i32_0 = arith.constant 0 : i32
    return %c0_i32, %arg0 : i32, i32
  }
  func.func @transform_2(%arg0: i32, %arg1: i32) -> (i32, i32) {
    %c0_i32 = arith.constant 0 : i32
    %c0_i32_0 = arith.constant 0 : i32
    return %c0_i32, %arg0 : i32, i32
  }
  func.func @transform_3(%arg0: i32, %arg1: i32) -> (i32, i32) {
    %c0_i32 = arith.constant 0 : i32
    %c0_i32_0 = arith.constant 0 : i32
    return %c0_i32, %arg0 : i32, i32
  }
  func.func @transform_4(%arg0: i32, %arg1: i32) -> (i32, i32) {
    %c0_i32 = arith.constant 0 : i32
    return %arg1, %arg0 : i32, i32
  }
}

</mosaic_0001>

<llo_original>
// kernel: tpu_custom_call.1
$region0: #{tpu_custom_call.1}
  #allocation0 [shape = 'u32[]', space=smem, size = 0x4, offset = 0x4, fixed_abs, tag = 'smem constant byte address 0x4 - core index']
  #allocation1 [shape = 'u32[144,128]{1,0:T(1,128)}', space=vmem, size = 0x12000, scoped, tag = 'internal scratch']
  %s0 = inlined_call_operand.hbm [shape: f32[32,128], index: 0, kind: input, shape index: {}]
  %s1 = inlined_call_operand.vmem [shape: f32[1,128], index: 1, kind: input, shape index: {}]
  %s2 = inlined_call_operand.vmem [shape: f32[1,128], index: 2, kind: input, shape index: {}]
  %s3 = inlined_call_operand.vmem [shape: f32[1,128], index: 3, kind: input, shape index: {}]
  %s4 = inlined_call_operand.hbm [shape: f32[32,128], index: 4, kind: output, shape index: {}]
  %s5 = sld [smem:[#allocation0]]
  $region30: #{tpu_custom_call.1} parent=0
    _
  %s7 = ssub.s32 1, %s5
  %s8 = scalar_select 0, %s7, %s5
  $region1: #{tpu_custom_call.1} parent=0
    #allocation2 [shape = 'u8[16384]{0}', space=vmem, size = 0x4000, scoped, tag = 'input window, operand 0, single buffered']
    #allocation3 [shape = 's32[1]{0}', space=sflag, size = 0x4, scoped, tag = 'scoped memory for tpu_custom_call.1']
    #allocation4 [shape = 's32[1]{0}', space=sflag, size = 0x4, scoped, tag = 'scoped memory for tpu_custom_call.1']
    #allocation5 [shape = 'u8[16384]{0}', space=vmem, size = 0x4000, scoped, tag = 'output window, operand 0, single buffered']
    %9 = vsyncpa [#allocation3], 0
    %10 = vsyncpa [#allocation4], 0
    // Predicated region
    $region2: #{tpu_custom_call.1} parent=1 // pred_check
      _
    $region3: #{tpu_custom_call.1} parent=1 // pred_check_branch
      %12 = sbr.rel (0) target = $region5
    $region4: #{tpu_custom_call.1} parent=1 // pred_region
      %s14 = ssub.s32 512, 512
      %15 = vsyncadd [#allocation3], %s14
      %s16 = sshll.u32 [#allocation2], 4
      %s17 = int_to_ptr.vmem [resolvable:$true] %s16
      %22 = dma.hbm_to_vmem [thread:$0]  %s0, 512, %s17, [#allocation3], 128, 128, 8
    $region5: #{tpu_custom_call.1} parent=1 // pred_fallthru
      _
    // Predicated region
    $region6: #{tpu_custom_call.1} parent=1 // pred_check
      _
    $region7: #{tpu_custom_call.1} parent=1 // pred_check_branch
      %24 = sbr.rel (0) target = $region9
    $region8: #{tpu_custom_call.1} parent=1 // pred_region
      _
    $region9: #{tpu_custom_call.1} parent=1 // pred_fallthru
      _
    // Predicated region
    $region10: #{tpu_custom_call.1} parent=1 // pred_check
      _
    $region11: #{tpu_custom_call.1} parent=1 // pred_check_branch
      %26 = sbr.rel (0) target = $region13
    $region12: #{tpu_custom_call.1} parent=1 // pred_region
      _
    $region13: #{tpu_custom_call.1} parent=1 // pred_fallthru
      _
    // Predicated region
    $region14: #{tpu_custom_call.1} parent=1 // pred_check
      _
    $region15: #{tpu_custom_call.1} parent=1 // pred_check_branch
      %28 = sbr.rel (0) target = $region17
    $region16: #{tpu_custom_call.1} parent=1 // pred_region
      _
    $region17: #{tpu_custom_call.1} parent=1 // pred_fallthru
      _
    // Predicated region
    $region18: #{tpu_custom_call.1} parent=1 // pred_check
      _
    $region19: #{tpu_custom_call.1} parent=1 // pred_check_branch
      %30 = sbr.rel (0) target = $region21
    $region20: #{tpu_custom_call.1} parent=1 // pred_region
      %31 = dma.done [#allocation3], 512
    $region21: #{tpu_custom_call.1} parent=1 // pred_fallthru
      _
    %v32 = vld [vmem:[#allocation2] sm:$0xff]
    %v33 = vld [vmem:[#allocation2 + $0x8] sm:$0xff]
    %v34 = vld [vmem:[#allocation2 + $0x10] sm:$0xff]
    %v35 = vld [vmem:[#allocation2 + $0x18] sm:$0xff]
    %v36 = vld [vmem:[%s1] sm:$0x1]
    %v37 = vld [vmem:[%s2] sm:$0x1]
    %v38 = vld [vmem:[%s3] sm:$0x1]
    %v39 = vadd.f32 %v32, 1.0
    %v40 = vlog2.pop %v39
    %v41 = vmul.f32 %v40, 0.6931472
    %v42 = vmul.f32 -0.5, %v32
    %v43 = vadd.f32 %v42, 1.0
    %v44 = vmul.f32 %v43, %v32
    %v45 = vand.u32 2147483647, %v32
    %vm46 = vcmp.lt.f32.partialorder %v45, 0.0004427343
    %v47 = vsel %vm46, %v44, %v41
    %v48 = vadd.f32 %v33, 1.0
    %v49 = vlog2.pop %v48
    %v50 = vmul.f32 %v49, 0.6931472
    %v51 = vmul.f32 -0.5, %v33
    %v52 = vadd.f32 %v51, 1.0
    %v53 = vmul.f32 %v52, %v33
    %v54 = vand.u32 2147483647, %v33
    %vm55 = vcmp.lt.f32.partialorder %v54, 0.0004427343
    %v56 = vsel %vm55, %v53, %v50
    %v57 = vadd.f32 %v34, 1.0
    %v58 = vlog2.pop %v57
    %v59 = vmul.f32 %v58, 0.6931472
    %v60 = vmul.f32 -0.5, %v34
    %v61 = vadd.f32 %v60, 1.0
    %v62 = vmul.f32 %v61, %v34
    %v63 = vand.u32 2147483647, %v34
    %vm64 = vcmp.lt.f32.partialorder %v63, 0.0004427343
    %v65 = vsel %vm64, %v62, %v59
    %v66 = vadd.f32 %v35, 1.0
    %v67 = vlog2.pop %v66
    %v68 = vmul.f32 %v67, 0.6931472
    %v69 = vmul.f32 -0.5, %v35
    %v70 = vadd.f32 %v69, 1.0
    %v71 = vmul.f32 %v70, %v35
    %v72 = vand.u32 2147483647, %v35
    %vm73 = vcmp.lt.f32.partialorder %v72, 0.0004427343
    %v74 = vsel %vm73, %v71, %v68
    %v76 = vlaneseq
    %v77 = vshrl.u32 %v76, 7
    %v78 = vsub.s32 0, %v77
    %v79 = vrot.slane %v36, %v78
    %v81 = vmul.f32 %v47, %v79
    %v82 = vmul.f32 %v56, %v79
    %v83 = vmul.f32 %v65, %v79
    %v84 = vmul.f32 %v74, %v79
    %v86 = vlaneseq
    %v87 = vshrl.u32 %v86, 7
    %v88 = vsub.s32 0, %v87
    %v89 = vrot.slane %v37, %v88
    %v91 = vadd.f32 %v81, %v89
    %v92 = vadd.f32 %v82, %v89
    %v93 = vadd.f32 %v83, %v89
    %v94 = vadd.f32 %v84, %v89
    %v95 = vmul.f32 %v91, 0.5
    %v96 = vmul.f32 %v92, 0.5
    %v97 = vmul.f32 %v93, 0.5
    %v98 = vmul.f32 %v94, 0.5
    %v99 = vtanh.pop %v95
    %v100 = vtanh.pop %v96
    %v101 = vtanh.pop %v97
    %v102 = vtanh.pop %v98
    %v103 = vmul.f32 %v99, 0.5
    %v104 = vmul.f32 %v100, 0.5
    %v105 = vmul.f32 %v101, 0.5
    %v106 = vmul.f32 %v102, 0.5
    %v108 = vlaneseq
    %v109 = vshrl.u32 %v108, 7
    %v110 = vsub.s32 0, %v109
    %v111 = vrot.slane %v38, %v110
    %v113 = vadd.f32 %v103, %v111
    %v114 = vadd.f32 %v104, %v111
    %v115 = vadd.f32 %v105, %v111
    %v116 = vadd.f32 %v106, %v111
    %117 = vst [vmem:[#allocation5] sm:$0xff] %v113
    %118 = vst [vmem:[#allocation5 + $0x8] sm:$0xff] %v114
    %119 = vst [vmem:[#allocation5 + $0x10] sm:$0xff] %v115
    %120 = vst [vmem:[#allocation5 + $0x18] sm:$0xff] %v116
    // Predicated region
    $region22: #{tpu_custom_call.1} parent=1 // pred_check
      _
    $region23: #{tpu_custom_call.1} parent=1 // pred_check_branch
      %122 = sbr.rel (0) target = $region25
    $region24: #{tpu_custom_call.1} parent=1 // pred_region
      %s124 = ssub.s32 512, 512
      %125 = vsyncadd [#allocation4], %s124
      %s126 = sshll.u32 [#allocation5], 4
      %s127 = int_to_ptr.vmem [resolvable:$true] %s126
      %132 = dma.vmem_to_hbm [thread:$0]  %s127, 512, %s4, [#allocation4], 128, 128, 8
    $region25: #{tpu_custom_call.1} parent=1 // pred_fallthru
      _
    // Predicated region
    $region26: #{tpu_custom_call.1} parent=1 // pred_check
      _
    $region27: #{tpu_custom_call.1} parent=1 // pred_check_branch
      %134 = sbr.rel (0) target = $region29
    $region28: #{tpu_custom_call.1} parent=1 // pred_region
      %135 = dma.done [#allocation4], 512
    $region29: #{tpu_custom_call.1} parent=1 // pred_fallthru
      _
    %136 = vsyncpa [#allocation3], 1
    %137 = vsyncpa [#allocation4], 1

</llo_original>
